<compile_context>
chip_gen: v6e
topology: v6e:2x2x1
jax: 0.10.0
libtpu: 0.0.40
codegen_flags: <defaults>
</compile_context>

<pallas_src>
import jax
import jax.numpy as jnp
import numpy as np
from jax import lax
from jax.experimental import pallas as pl
from jax.experimental.pallas import tpu as pltpu


def _atrous_conv_kernel(x_ref, w_ref, o_ref):
    """Fused-tap dilated conv as one matmul per batch element.

    x_ref: (bb, Kp, HW) bf16  im2col rows = (kh, kw, ci) taps + ones row + pad
    w_ref: (Cout, Kp)   bf16  matching columns, bias folded into the ones column
    o_ref: (bb, Cout, HW) f32 lane-dense output (HW = H_out * W_out)
    """
    w = w_ref[...]
    # Static loop: bb == 1 on v7x (batch split across the 2 TCs by the grid),
    # bb == B on single-TC chips (grid collapsed to one step).
    for b in range(x_ref.shape[0]):
        o_ref[b] = jnp.dot(
            w, x_ref[b], preferred_element_type=jnp.float32
        ).astype(o_ref.dtype)


def _num_tensorcores_per_chip():
    try:
        kind = jax.devices()[0].device_kind.lower()
        if "v7" in kind:
            return 2
    except Exception:
        pass
    return 1


def atrous_conv2d(x_nchw, weight_oihw, bias, *, rate, padding):
    """Dilated conv2d matching torch.nn.Conv2d(..., padding=padding, dilation=rate).

    x_nchw:      (B, Cin, H, W)      float32
    weight_oihw: (Cout, Cin, K, K)   float32 (PyTorch layout)
    bias:        (Cout,)             float32
    returns:     (B, Cout, H_out, W_out) float32
    """
    B, Cin, H, W = x_nchw.shape
    Cout, _, K, _ = weight_oihw.shape
    H_out = H + 2 * padding - rate * (K - 1)
    W_out = W + 2 * padding - rate * (K - 1)
    HW = H_out * W_out

    # Contraction rows: K*K dilated taps x Cin, + 1 ones row (bias fold),
    # zero-padded to a multiple of 16 (bf16 sublane tile) -> no masked sublanes.
    n_taps = K * K * Cin
    Kp = ((n_taps + 1 + 15) // 16) * 16

    # Single fused prep pass over x: zero-pad, take the K*K dilated (kh, kw)
    # shifts cropped to (H_out, W_out), collapse to (B, n_taps, HW), append the
    # ones row + zero rows, cast to bf16.  Replication is ~K^2 but only ~24 KB
    # per batch element at this size (see large-image TODO above).
    x_p = jnp.pad(x_nchw,
                  ((0, 0), (0, 0), (padding, padding), (padding, padding)))
    slabs = [x_p[:, :, kh * rate:kh * rate + H_out, kw * rate:kw * rate + W_out]
             for kh in range(K) for kw in range(K)]
    xc = jnp.stack(slabs, axis=1).reshape(B, n_taps, HW)
    xc = jnp.concatenate(
        [xc,
         jnp.ones((B, 1, HW), xc.dtype),
         jnp.zeros((B, Kp - n_taps - 1, HW), xc.dtype)],
        axis=1).astype(jnp.bfloat16)

    # Weight columns ordered (kh, kw, ci) to match the im2col rows; bias in the
    # column multiplying the ones row; zero-pad remaining columns.
    w_cols = jnp.transpose(weight_oihw, (0, 2, 3, 1)).reshape(Cout, n_taps)
    w_full = jnp.concatenate(
        [w_cols,
         bias.reshape(Cout, 1),
         jnp.zeros((Cout, Kp - n_taps - 1), w_cols.dtype)],
        axis=1).astype(jnp.bfloat16)

    # Grid: 2 parallel points on v7x (one batch element per TensorCore);
    # a single step with an in-kernel static batch loop on v5e/v6e.
    if _num_tensorcores_per_chip() >= 2 and B >= 2:
        grid = (B,)
        x_spec = pl.BlockSpec((1, Kp, HW), lambda b: (b, 0, 0))
        o_spec = pl.BlockSpec((1, Cout, HW), lambda b: (b, 0, 0))
    else:
        grid = (1,)
        x_spec = pl.BlockSpec((B, Kp, HW), lambda b: (0, 0, 0))
        o_spec = pl.BlockSpec((B, Cout, HW), lambda b: (0, 0, 0))
    w_spec = pl.BlockSpec((Cout, Kp), lambda b: (0, 0))

    out = pl.pallas_call(
        _atrous_conv_kernel,
        out_shape=jax.ShapeDtypeStruct((B, Cout, HW), jnp.float32),
        grid_spec=pltpu.PrefetchScalarGridSpec(
            num_scalar_prefetch=0,
            grid=grid,
            in_specs=[x_spec, w_spec],
            out_specs=o_spec,
        ),
        compiler_params=pltpu.CompilerParams(
            dimension_semantics=("parallel",)),
    )(xc, w_full)

    # Free row-major reshape back to NCHW output; no transpose pass needed.
    return out.reshape(B, Cout, H_out, W_out)


if __name__ == "__main__":
    # Module config (deterministic, synthetic): AtrousConv2d(4, 8, 3, rate=2, padding=2)
    in_channels, out_channels, kernel_size, rate, padding = 4, 8, 3, 2, 2
    B, H, W = 2, 16, 16

    key = jax.random.PRNGKey(0)
    kx, kw, kb = jax.random.split(key, 3)
    x = jax.random.normal(kx, (B, in_channels, H, W), dtype=jnp.float32)
    weight = jax.random.normal(
        kw, (out_channels, in_channels, kernel_size, kernel_size),
        dtype=jnp.float32) * 0.1
    bias = jax.random.normal(kb, (out_channels,), dtype=jnp.float32) * 0.1

    out = atrous_conv2d(x, weight, bias, rate=rate, padding=padding)
    out = jax.block_until_ready(out)

    # Reference: XLA dilated conv on the same bf16-rounded operands (the Pallas
    # kernel uses bf16 MXU operands -- including the folded bias -- with f32
    # accumulation; users needing f32-exact Conv2d should keep operands in f32).
    x_b = x.astype(jnp.bfloat16).astype(jnp.float32)
    w_b = weight.astype(jnp.bfloat16).astype(jnp.float32)
    b_b = bias.astype(jnp.bfloat16).astype(jnp.float32)
    ref = lax.conv_general_dilated(
        x_b, w_b, window_strides=(1, 1),
        padding=((padding, padding), (padding, padding)),
        rhs_dilation=(rate, rate),
        dimension_numbers=("NCHW", "OIHW", "NCHW"),
        precision=lax.Precision.HIGHEST,
    ) + b_b[None, :, None, None]
    np.testing.assert_allclose(np.asarray(out), np.asarray(ref),
                               rtol=1e-3, atol=1e-3)

    print("KERNEL_OK")
</pallas_src>

<mosaic_0001>
module attributes {stable_mosaic.version = 11 : i64} {
  func.func @_atrous_conv_kernel(%arg0: i32, %arg1: memref<2x48x256xbf16, #tpu.memory_space<vmem>>, %arg2: memref<8x48xbf16, #tpu.memory_space<vmem>>, %arg3: memref<2x8x256xf32, #tpu.memory_space<vmem>>) attributes {dimension_semantics = [#tpu.dimension_semantics<parallel>], iteration_bounds = array<i64: 1>, scalar_prefetch = 0 : i64, scratch_operands = 0 : i64, tpu.core_type = #tpu.core_type<tc>, window_params = [{pipeline_mode = #tpu.pipeline_mode<synchronous>, transform_indices = @transform_0, window_bounds = array<i64: 2, 48, 256>}, {pipeline_mode = #tpu.pipeline_mode<synchronous>, transform_indices = @transform_1, window_bounds = array<i64: 8, 48>}, {pipeline_mode = #tpu.pipeline_mode<synchronous>, transform_indices = @transform_2, window_bounds = array<i64: 2, 8, 256>}]} {
    %c0 = arith.constant 0 : index
    %c0_0 = arith.constant 0 : index
    %0 = vector.load %arg2[%c0, %c0_0] : memref<8x48xbf16, #tpu.memory_space<vmem>>, vector<8x48xbf16>
    %c0_1 = arith.constant 0 : index
    %c0_2 = arith.constant 0 : index
    %c0_3 = arith.constant 0 : index
    %1 = vector.load %arg1[%c0_1, %c0_2, %c0_3] : memref<2x48x256xbf16, #tpu.memory_space<vmem>>, vector<1x48x256xbf16>
    %2 = vector.shape_cast %1 : vector<1x48x256xbf16> to vector<48x256xbf16>
    %cst = arith.constant dense<0.000000e+00> : vector<8x256xf32>
    %3 = tpu.matmul %0, %2, %cst {dimension_numbers = #tpu.dot_dimension_numbers<[1], [0], [0], [1], [0, 0, 1, 1], [], []>} : vector<8x48xbf16>, vector<48x256xbf16>, vector<8x256xf32> -> vector<8x256xf32>
    %c0_4 = arith.constant 0 : index
    %c0_5 = arith.constant 0 : index
    %c0_6 = arith.constant 0 : index
    %4 = vector.load %arg3[%c0_4, %c0_5, %c0_6] : memref<2x8x256xf32, #tpu.memory_space<vmem>>, vector<1x8x256xf32>
    %5 = vector.shape_cast %4 : vector<1x8x256xf32> to vector<8x256xf32>
    %6 = vector.shape_cast %3 : vector<8x256xf32> to vector<1x8x256xf32>
    tpu.vector_store %arg3[%c0_4, %c0_5, %c0_6], %6 {strides = array<i32>} : memref<2x8x256xf32, #tpu.memory_space<vmem>>, vector<1x8x256xf32>,
    %c1 = arith.constant 1 : index
    %c0_7 = arith.constant 0 : index
    %c0_8 = arith.constant 0 : index
    %7 = vector.load %arg1[%c1, %c0_7, %c0_8] : memref<2x48x256xbf16, #tpu.memory_space<vmem>>, vector<1x48x256xbf16>
    %8 = vector.shape_cast %7 : vector<1x48x256xbf16> to vector<48x256xbf16>
    %cst_9 = arith.constant dense<0.000000e+00> : vector<8x256xf32>
    %9 = tpu.matmul %0, %8, %cst_9 {dimension_numbers = #tpu.dot_dimension_numbers<[1], [0], [0], [1], [0, 0, 1, 1], [], []>} : vector<8x48xbf16>, vector<48x256xbf16>, vector<8x256xf32> -> vector<8x256xf32>
    %c1_10 = arith.constant 1 : index
    %c0_11 = arith.constant 0 : index
    %c0_12 = arith.constant 0 : index
    %10 = vector.load %arg3[%c1_10, %c0_11, %c0_12] : memref<2x8x256xf32, #tpu.memory_space<vmem>>, vector<1x8x256xf32>
    %11 = vector.shape_cast %10 : vector<1x8x256xf32> to vector<8x256xf32>
    %12 = vector.shape_cast %9 : vector<8x256xf32> to vector<1x8x256xf32>
    tpu.vector_store %arg3[%c1_10, %c0_11, %c0_12], %12 {strides = array<i32>} : memref<2x8x256xf32, #tpu.memory_space<vmem>>, vector<1x8x256xf32>,
    return
  }
  func.func @transform_0(%arg0: i32) -> (i32, i32, i32) {
    %c0_i32 = arith.constant 0 : i32
    %c0_i32_0 = arith.constant 0 : i32
    %c0_i32_1 = arith.constant 0 : i32
    %c0_i32_2 = arith.constant 0 : i32
    return %c0_i32, %c0_i32_0, %c0_i32_1 : i32, i32, i32
  }
  func.func @transform_1(%arg0: i32) -> (i32, i32) {
    %c0_i32 = arith.constant 0 : i32
    %c0_i32_0 = arith.constant 0 : i32
    %c0_i32_1 = arith.constant 0 : i32
    return %c0_i32, %c0_i32_0 : i32, i32
  }
  func.func @transform_2(%arg0: i32) -> (i32, i32, i32) {
    %c0_i32 = arith.constant 0 : i32
    %c0_i32_0 = arith.constant 0 : i32
    %c0_i32_1 = arith.constant 0 : i32
    %c0_i32_2 = arith.constant 0 : i32
    return %c0_i32, %c0_i32_0, %c0_i32_1 : i32, i32, i32
  }
}

</mosaic_0001>

<llo_original>
// kernel: tpu_custom_call.1
$region0: #{tpu_custom_call.1}
  #allocation0 [shape = 'u32[]', space=smem, size = 0x4, offset = 0x4, fixed_abs, tag = 'smem constant byte address 0x4 - core index']
  #allocation1 [shape = 'u32[144,128]{1,0:T(1,128)}', space=vmem, size = 0x12000, scoped, tag = 'internal scratch']
  %s0 = inlined_call_operand.hbm [shape: bf16[2,48,256], index: 0, kind: input, shape index: {}]
  %s1 = inlined_call_operand.hbm [shape: bf16[8,48], index: 1, kind: input, shape index: {}]
  %s2 = inlined_call_operand.hbm [shape: f32[2,8,256], index: 2, kind: output, shape index: {}]
  %s3 = sld [smem:[#allocation0]]
  $region26: #{tpu_custom_call.1} parent=0
    _
  %s5 = ssub.s32 1, %s3
  %s6 = scalar_select 0, %s5, %s3
  $region1: #{tpu_custom_call.1} parent=0
    #allocation2 [shape = 'u8[49152]{0}', space=vmem, size = 0xc000, scoped, tag = 'input window, operand 0, single buffered']
    #allocation3 [shape = 's32[1]{0}', space=sflag, size = 0x4, scoped, tag = 'scoped memory for tpu_custom_call.1']
    #allocation4 [shape = 's32[1]{0}', space=sflag, size = 0x4, scoped, tag = 'scoped memory for tpu_custom_call.1']
    #allocation5 [shape = 'u8[2048]{0}', space=vmem, size = 0x800, scoped, tag = 'input window, operand 1, single buffered']
    #allocation6 [shape = 's32[1]{0}', space=sflag, size = 0x4, scoped, tag = 'scoped memory for tpu_custom_call.1']
    #allocation7 [shape = 'u8[16384]{0}', space=vmem, size = 0x4000, scoped, tag = 'output window, operand 0, single buffered']
    %7 = vsyncpa [#allocation3], 0
    %8 = vsyncpa [#allocation6], 0
    %9 = vsyncpa [#allocation4], 0
    // Predicated region
    $region2: #{tpu_custom_call.1} parent=1 // pred_check
      _
    $region3: #{tpu_custom_call.1} parent=1 // pred_check_branch
      %11 = sbr.rel (0) target = $region5
    $region4: #{tpu_custom_call.1} parent=1 // pred_region
      %s13 = ssub.s32 1536, 1536
      %14 = vsyncadd [#allocation3], %s13
      %s15 = sshll.u32 [#allocation2], 4
      %s16 = int_to_ptr.vmem [resolvable:$true] %s15
      %21 = dma.hbm_to_vmem [thread:$0]  %s0, 1536, %s16, [#allocation3], 128, 128, 8
    $region5: #{tpu_custom_call.1} parent=1 // pred_fallthru
      _
    // Predicated region
    $region6: #{tpu_custom_call.1} parent=1 // pred_check
      _
    $region7: #{tpu_custom_call.1} parent=1 // pred_check_branch
      %23 = sbr.rel (0) target = $region9
    $region8: #{tpu_custom_call.1} parent=1 // pred_region
      %s25 = ssub.s32 64, 64
      %26 = vsyncadd [#allocation6], %s25
      %s28 = sshll.u32 [#allocation5], 4
      %s29 = int_to_ptr.vmem [resolvable:$true] %s28
      %31 = dma.hbm_to_vmem [thread:$0]  %s1, 64, %s29, [#allocation6]
    $region9: #{tpu_custom_call.1} parent=1 // pred_fallthru
      _
    // Predicated region
    $region10: #{tpu_custom_call.1} parent=1 // pred_check
      _
    $region11: #{tpu_custom_call.1} parent=1 // pred_check_branch
      %33 = sbr.rel (0) target = $region13
    $region12: #{tpu_custom_call.1} parent=1 // pred_region
      %34 = dma.done [#allocation3], 1536
    $region13: #{tpu_custom_call.1} parent=1 // pred_fallthru
      _
    // Predicated region
    $region14: #{tpu_custom_call.1} parent=1 // pred_check
      _
    $region15: #{tpu_custom_call.1} parent=1 // pred_check_branch
      %36 = sbr.rel (0) target = $region17
    $region16: #{tpu_custom_call.1} parent=1 // pred_region
      %37 = dma.done [#allocation6], 64
    $region17: #{tpu_custom_call.1} parent=1 // pred_fallthru
      _
    %v39 = vld [vmem:[#allocation5] sm:$0xf]
    %v40 = vld [vmem:[#allocation2] sm:$0xff]
    %v41 = vld [vmem:[#allocation2 + $0x8] sm:$0xff]
    %v42 = vld [vmem:[#allocation2 + $0x10] sm:$0xff]
    %v43 = vld [vmem:[#allocation2 + $0x18] sm:$0xff]
    %v44 = vld [vmem:[#allocation2 + $0x20] sm:$0xff]
    %v45 = vld [vmem:[#allocation2 + $0x28] sm:$0xff]
    %v52 = vunpack.c.l.b16 %v40
    %v53 = vunpack.c.h.b16 %v40
    %v54 = vunpack.c.l.b16 %v41
    %v55 = vunpack.c.h.b16 %v41
    %v56 = vunpack.c.l.b16 %v42
    %v57 = vunpack.c.h.b16 %v42
    %v58 = vunpack.c.l.b16 %v43
    %v59 = vunpack.c.h.b16 %v43
    %v60 = vunpack.c.l.b16 %v44
    %v61 = vunpack.c.h.b16 %v44
    %v62 = vunpack.c.l.b16 %v45
    %v63 = vunpack.c.h.b16 %v45
    %v64 = vpack.c.b16 %v54, %v52
    %v65 = vpack.c.b16 %v55, %v53
    %v66 = vpack.c.b16 %v58, %v56
    %v67 = vpack.c.b16 %v59, %v57
    %v68 = vpack.c.b16 %v62, %v60
    %v69 = vpack.c.b16 %v63, %v61
    %vm76 = vcmask 392192
    %v78 = vsel %vm76, %v39, 0
    %80 = vmatprep.subr.bf16.mxu0 0
    %81 = vmatpush1.bf16.msra.mxu0 0
    %82 = vmatprep.subr.bf16.mxu0 0
    %83 = vmatpush1.bf16.msra.mxu0 0
    %84 = vmatprep.subr.bf16.mxu0 0
    %85 = vmatpush1.bf16.msra.mxu0 0
    %86 = vmatprep.subr.bf16.mxu0 0
    %87 = vmatpush1.bf16.msra.mxu0 0
    %88 = vmatprep.subr.bf16.mxu0 0
    %89 = vmatpush1.bf16.msra.mxu0 0
    %90 = vmatprep.subr.bf16.mxu0 %v69
    %91 = vmatpush1.bf16.msra.mxu0 %v68
    %92 = vmatprep.subr.bf16.mxu0 %v67
    %93 = vmatpush1.bf16.msra.mxu0 %v66
    %94 = vmatprep.subr.bf16.mxu0 %v65
    %95 = vmatpush1.bf16.msra.mxu0 %v64
    %96 = vmatprep.subr.bf16.mxu0 0
    %97 = vmatpush2.bf16.msra.mxu0 0
    %98 = vmatprep.subr.bf16.mxu0 0
    %99 = vmatpush2.bf16.msra.mxu0 0
    %100 = vmatprep.subr.bf16.mxu0 0
    %101 = vmatpush2.bf16.msra.mxu0 0
    %102 = vmatprep.subr.bf16.mxu0 0
    %103 = vmatpush2.bf16.msra.mxu0 0
    %104 = vmatprep.subr.bf16.mxu0 0
    %105 = vmatpush2.bf16.msra.mxu0 0
    %106 = vmatprep.subr.bf16.mxu0 0
    %107 = vmatpush2.bf16.msra.mxu0 0
    %108 = vmatprep.subr.bf16.mxu0 0
    %109 = vmatpush2.bf16.msra.mxu0 0
    %110 = vmatprep.subr.bf16.mxu0 0
    %111 = vmatpush2.bf16.msra.mxu0 0
    %112 = vmatprep.mubr.bf16.mxu0 0
    %113 = vmatmul.mubr.bf16.gmra.mxu0 %v78
    %v114 = vpop.f32.mrf.mxu0
    %v115 = vadd.f32 0.0, %v114
    %v116 = vpop.f32.mrf.mxu0
    %v117 = vadd.f32 0.0, %v116
    %v118 = vpop.f32.mrf.mxu0
    %v119 = vpop.f32.mrf.mxu0
    %120 = vdwg.mxu0
    %121 = vst [vmem:[#allocation7] sm:$0xff] %v115
    %122 = vst [vmem:[#allocation7 + $0x8] sm:$0xff] %v117
    %s123 = scalar_lea.vmem [#allocation2], 48
    %v124 = vld [vmem:[%s123] sm:$0xff]
    %v125 = vld [vmem:[%s123 + $0x8] sm:$0xff]
    %v126 = vld [vmem:[%s123 + $0x10] sm:$0xff]
    %v127 = vld [vmem:[%s123 + $0x18] sm:$0xff]
    %v128 = vld [vmem:[%s123 + $0x20] sm:$0xff]
    %v129 = vld [vmem:[%s123 + $0x28] sm:$0xff]
    %v136 = vunpack.c.l.b16 %v124
    %v137 = vunpack.c.h.b16 %v124
    %v138 = vunpack.c.l.b16 %v125
    %v139 = vunpack.c.h.b16 %v125
    %v140 = vunpack.c.l.b16 %v126
    %v141 = vunpack.c.h.b16 %v126
    %v142 = vunpack.c.l.b16 %v127
    %v143 = vunpack.c.h.b16 %v127
    %v144 = vunpack.c.l.b16 %v128
    %v145 = vunpack.c.h.b16 %v128
    %v146 = vunpack.c.l.b16 %v129
    %v147 = vunpack.c.h.b16 %v129
    %v148 = vpack.c.b16 %v138, %v136
    %v149 = vpack.c.b16 %v139, %v137
    %v150 = vpack.c.b16 %v142, %v140
    %v151 = vpack.c.b16 %v143, %v141
    %v152 = vpack.c.b16 %v146, %v144
    %v153 = vpack.c.b16 %v147, %v145
    %160 = vmatprep.subr.bf16.mxu0 0
    %161 = vmatpush1.bf16.msra.mxu0 0
    %162 = vmatprep.subr.bf16.mxu0 0
    %163 = vmatpush1.bf16.msra.mxu0 0
    %164 = vmatprep.subr.bf16.mxu0 0
    %165 = vmatpush1.bf16.msra.mxu0 0
    %166 = vmatprep.subr.bf16.mxu0 0
    %167 = vmatpush1.bf16.msra.mxu0 0
    %168 = vmatprep.subr.bf16.mxu0 0
    %169 = vmatpush1.bf16.msra.mxu0 0
    %170 = vmatprep.subr.bf16.mxu0 %v153
    %171 = vmatpush1.bf16.msra.mxu0 %v152
    %172 = vmatprep.subr.bf16.mxu0 %v151
    %173 = vmatpush1.bf16.msra.mxu0 %v150
    %174 = vmatprep.subr.bf16.mxu0 %v149
    %175 = vmatpush1.bf16.msra.mxu0 %v148
    %176 = vmatprep.subr.bf16.mxu0 0
    %177 = vmatpush2.bf16.msra.mxu0 0
    %178 = vmatprep.subr.bf16.mxu0 0
    %179 = vmatpush2.bf16.msra.mxu0 0
    %180 = vmatprep.subr.bf16.mxu0 0
    %181 = vmatpush2.bf16.msra.mxu0 0
    %182 = vmatprep.subr.bf16.mxu0 0
    %183 = vmatpush2.bf16.msra.mxu0 0
    %184 = vmatprep.subr.bf16.mxu0 0
    %185 = vmatpush2.bf16.msra.mxu0 0
    %186 = vmatprep.subr.bf16.mxu0 0
    %187 = vmatpush2.bf16.msra.mxu0 0
    %188 = vmatprep.subr.bf16.mxu0 0
    %189 = vmatpush2.bf16.msra.mxu0 0
    %190 = vmatprep.subr.bf16.mxu0 0
    %191 = vmatpush2.bf16.msra.mxu0 0
    %192 = vmatprep.mubr.bf16.mxu0 0
    %193 = vmatmul.mubr.bf16.gmra.mxu0 %v78
    %v194 = vpop.f32.mrf.mxu0
    %v195 = vadd.f32 0.0, %v194
    %v196 = vpop.f32.mrf.mxu0
    %v197 = vadd.f32 0.0, %v196
    %v198 = vpop.f32.mrf.mxu0
    %v199 = vpop.f32.mrf.mxu0
    %200 = vdwg.mxu0
    %s201 = scalar_lea.vmem [#allocation7], 16
    %202 = vst [vmem:[%s201] sm:$0xff] %v195
    %203 = vst [vmem:[%s201 + $0x8] sm:$0xff] %v197
    // Predicated region
    $region18: #{tpu_custom_call.1} parent=1 // pred_check
      _
    $region19: #{tpu_custom_call.1} parent=1 // pred_check_branch
      %205 = sbr.rel (0) target = $region21
    $region20: #{tpu_custom_call.1} parent=1 // pred_region
      %s207 = ssub.s32 512, 512
      %208 = vsyncadd [#allocation4], %s207
      %s209 = sshll.u32 [#allocation7], 4
      %s210 = int_to_ptr.vmem [resolvable:$true] %s209
      %215 = dma.vmem_to_hbm [thread:$0]  %s210, 512, %s2, [#allocation4], 256, 256, 16
    $region21: #{tpu_custom_call.1} parent=1 // pred_fallthru
      _
    // Predicated region
    $region22: #{tpu_custom_call.1} parent=1 // pred_check
      _
    $region23: #{tpu_custom_call.1} parent=1 // pred_check_branch
      %217 = sbr.rel (0) target = $region25
    $region24: #{tpu_custom_call.1} parent=1 // pred_region
      %218 = dma.done [#allocation4], 512
    $region25: #{tpu_custom_call.1} parent=1 // pred_fallthru
      _
    %219 = vsyncpa [#allocation3], 1
    %220 = vsyncpa [#allocation6], 1
    %221 = vsyncpa [#allocation4], 1

</llo_original>
